<compile_context>
chip_gen: v7x
topology: tpu7x:2x2x1
jax: 0.10.0
libtpu: 0.0.40
codegen_flags: <defaults>
</compile_context>

<pallas_src>
import functools

import jax
import jax.numpy as jnp
from jax import lax
from jax.experimental import pallas as pl
from jax.experimental.pallas import tpu as pltpu


_LANES = 128


def _cdiv(a, b):
    return -(-a // b)


def _hw_params():
    """(target_block_bytes, vmem_limit_bytes), tuned per TPU generation."""
    vmem = None
    try:
        vmem = getattr(pltpu.get_tpu_info(), "vmem_capacity_bytes", None)
    except Exception:
        vmem = None
    if vmem is not None and vmem >= (96 << 20):
        # v5e / v6e: 128 MiB physical VMEM -> 4 MiB blocks, 64 MiB scoped limit.
        return 4 << 20, 64 << 20
    # v7x (64 MiB physical VMEM) or unknown: stay conservative.
    return 2 << 20, 32 << 20


def _choose_blk(b, c, hw, in_dtype, target_bytes, vmem_limit):
    """Pixel-block size (multiple of 128) shared by both kernels."""
    itemsize = jnp.dtype(in_dtype).itemsize

    def padded(n, isz):  # sublane padding of an (n, blk) slab in VMEM
        m = max(1, 32 // isz)
        return _cdiv(n, m) * m

    # Padded, double-buffered VMEM bytes per pixel column, for each kernel.
    k1 = 2 * 2 * b * padded(c, itemsize) * itemsize + 2 * padded(b, 4) * 4
    k2 = 2 * 2 * padded(b, 4) * 4 + 2 * padded(b, 1) * 1
    per_col = max(k1, k2)
    budget = (3 * vmem_limit) // 4
    blk_cap = max(_LANES, (budget // per_col) // _LANES * _LANES)

    blk = max(_LANES, (target_bytes // max(b * c * itemsize, 1)) // _LANES * _LANES)
    blk = min(blk, blk_cap, _cdiv(hw, _LANES) * _LANES)
    if hw > _LANES:
        # Keep >= 2 grid steps so both v7x TensorCores get work.
        blk = min(blk, _cdiv(_cdiv(hw, 2), _LANES) * _LANES)
    return max(blk, _LANES)


# ----------------------------- Pallas kernels ------------------------------

def _res_kernel(x_ref, y_ref, res_ref):
    # x_ref, y_ref: (b, c, blk) native dtype; res_ref: (b, blk) f32.
    # abs-diff stays in the native dtype; only the channel sum is f32.
    x = x_ref[...]
    y = y_ref[...]
    acc = jnp.zeros(res_ref.shape, jnp.float32)
    for ci in range(x.shape[1]):           # static unroll over (small) channel count
        acc = acc + jnp.abs(x[:, ci, :] - y[:, ci, :]).astype(jnp.float32)
    res_ref[...] = acc


def _mask_kernel(thre_ref, res_ref, rand_ref, mask_ref):
    # thre_ref: (b, 1) f32; res_ref/mask_ref: (b, blk) f32; rand_ref: (b, blk) int8.
    hard = res_ref[...] > thre_ref[...]    # broadcast compare over the lane axis
    rnd = rand_ref[...] != 0
    mask_ref[...] = (hard | rnd).astype(jnp.float32)


# ------------------------------ pallas_call wrappers ------------------------

def _channel_abs_diff_sum(x3, y3, blk, vmem_limit):
    b, c, hw = x3.shape
    grid = (_cdiv(hw, blk),)
    in_spec = pl.BlockSpec((b, c, blk), lambda j: (0, 0, j))
    out_spec = pl.BlockSpec((b, blk), lambda j: (0, j))
    return pl.pallas_call(
        _res_kernel,
        out_shape=jax.ShapeDtypeStruct((b, hw), jnp.float32),
        grid_spec=pltpu.PrefetchScalarGridSpec(
            num_scalar_prefetch=0,
            grid=grid,
            in_specs=[in_spec, in_spec],
            out_specs=out_spec,
        ),
        compiler_params=pltpu.CompilerParams(
            dimension_semantics=("parallel",),
            vmem_limit_bytes=vmem_limit,
        ),
    )(x3, y3)


def _combine_mask(thre2, res2, rand2, blk, vmem_limit):
    b, hw = res2.shape
    grid = (_cdiv(hw, blk),)
    data_spec = pl.BlockSpec((b, blk), lambda j: (0, j))
    thre_spec = pl.BlockSpec((b, 1), lambda j: (0, 0))
    return pl.pallas_call(
        _mask_kernel,
        out_shape=jax.ShapeDtypeStruct((b, hw), jnp.float32),
        grid_spec=pltpu.PrefetchScalarGridSpec(
            num_scalar_prefetch=0,
            grid=grid,
            in_specs=[thre_spec, data_spec, data_spec],
            out_specs=data_spec,
        ),
        input_output_aliases={1: 0},   # res2 is dead afterwards -> reuse for mask
        compiler_params=pltpu.CompilerParams(
            dimension_semantics=("parallel",),
            vmem_limit_bytes=vmem_limit,
        ),
    )(thre2, res2, rand2)


# --------------------- sort-free exact k-th largest ------------------------

def _kth_largest(res2, k):
    """Exact per-image value at index `k` of the descending sort of `res2`.

    res2 >= 0, so its float32 bit pattern viewed as int32 is order-preserving.
    A fixed 32-step counting bisection over that pattern (one mem-bound
    compare+reduce per step) finds the exact k-th largest value — no sort.
    """
    b = res2.shape[0]
    u = lax.bitcast_convert_type(res2, jnp.int32)          # non-negative patterns
    k32 = jnp.int32(k)
    lo0 = jnp.full((b,), -1, dtype=jnp.int32)              # count(> lo) >= k+1
    hi0 = jnp.full((b,), 0x7F800000, dtype=jnp.int32)      # +inf bits: count(> hi) == 0

    def body(_, lohi):
        lo, hi = lohi
        active = (lo + 1) < hi
        mid = lo + (hi - lo) // 2
        cnt = jnp.sum((u > mid[:, None]).astype(jnp.int32), axis=1)
        go_hi = cnt <= k32
        hi = jnp.where(active & go_hi, mid, hi)
        lo = jnp.where(active & (~go_hi), mid, lo)
        return lo, hi

    _, hi = lax.fori_loop(0, 32, body, (lo0, hi0))
    return lax.bitcast_convert_type(hi, jnp.float32)       # (b,) exact threshold


# --------------------------------- forward ----------------------------------

@functools.partial(jax.jit, static_argnames=("hard_thre_p", "random_thre_p"))
def hem_forward(x, y, rng_key, hard_thre_p=0.5, random_thre_p=0.1):
    """Forward pass of HEM: float32 mask of shape (b, 1, h, w)."""
    b, c, h, w = x.shape
    hw = h * w
    target_bytes, vmem_limit = _hw_params()
    blk = _choose_blk(b, c, hw, x.dtype, target_bytes, vmem_limit)

    # Free reshapes only — no host-side padding copies of x / y.
    x3 = x.reshape(b, c, hw)
    y3 = y.reshape(b, c, hw)

    # --- Pallas kernel 1: res = sum_c |x - y| -------------------------------
    res2 = _channel_abs_diff_sum(x3, y3, blk, vmem_limit)         # (b, hw) f32

    # --- exact k-th largest value per image (no sort) -----------------------
    hard_thre_ind = min(int(hard_thre_p * hw), hw - 1)            # defensive clamp
    thre = _kth_largest(res2, hard_thre_ind)                      # (b,) f32

    # --- random mask with exactly random_thre_ind ones per image (int8) -----
    random_thre_ind = int(random_thre_p * hw)
    keys = jax.random.split(rng_key, b)

    def one_random_mask(key):
        perm = jax.random.permutation(key, hw)
        return (perm < random_thre_ind).astype(jnp.int8)

    rand2 = jax.vmap(one_random_mask)(keys)                       # (b, hw) int8

    # --- Pallas kernel 2: mask = ((res > thre) | rand) as f32 ---------------
    mask2 = _combine_mask(thre.reshape(b, 1), res2, rand2, blk, vmem_limit)
    return mask2.reshape(b, 1, h, w)


# --------------------------------- main --------------------------------------

if __name__ == "__main__":
    b, c, h, w = 2, 4, 16, 16
    key = jax.random.PRNGKey(0)
    kx, ky, krand = jax.random.split(key, 3)

    x = jax.random.normal(kx, (b, c, h, w), dtype=jnp.float32)
    y = jax.random.normal(ky, (b, c, h, w), dtype=jnp.float32)

    mask = hem_forward(x, y, krand, hard_thre_p=0.5, random_thre_p=0.1)
    mask = jax.block_until_ready(mask)

    assert mask.shape == (b, 1, h, w)
    assert mask.dtype == jnp.float32
    # mask values must be exactly 0.0 or 1.0
    assert bool(jnp.all((mask == 0.0) | (mask == 1.0)))

    # pure-JAX reference (tolerant: f32 summation-order ulp differences may
    # flip an isolated pixel that sits exactly on the threshold)
    hw = h * w
    res_r = jnp.sum(jnp.abs(x - y), axis=1).reshape(b, hw)
    thre_r = -jnp.sort(-res_r, axis=-1)[:, min(int(0.5 * hw), hw - 1)]
    hard_r = res_r > thre_r[:, None]
    keys = jax.random.split(krand, b)
    rand_r = jax.vmap(lambda kk: jax.random.permutation(kk, hw) < int(0.1 * hw))(keys)
    ref = (hard_r | rand_r).astype(jnp.float32).reshape(b, 1, h, w)
    assert float(jnp.mean(jnp.abs(mask - ref))) < 1e-2

    print("KERNEL_OK")
</pallas_src>

<mosaic_0001>
module attributes {stable_mosaic.version = 11 : i64} {
  func.func @_res_kernel(%arg0: i32, %arg1: memref<2x4x128xf32, #tpu.memory_space<vmem>>, %arg2: memref<2x4x128xf32, #tpu.memory_space<vmem>>, %arg3: memref<2x128xf32, #tpu.memory_space<vmem>>) attributes {dimension_semantics = [#tpu.dimension_semantics<parallel>], iteration_bounds = array<i64: 2>, scalar_prefetch = 0 : i64, scratch_operands = 0 : i64, tpu.core_type = #tpu.core_type<tc>, window_params = [{transform_indices = @transform_0, window_bounds = array<i64: 2, 4, 128>}, {transform_indices = @transform_1, window_bounds = array<i64: 2, 4, 128>}, {transform_indices = @transform_2, window_bounds = array<i64: 2, 128>}]} {
    %c0 = arith.constant 0 : index
    %c0_0 = arith.constant 0 : index
    %c0_1 = arith.constant 0 : index
    %0 = vector.load %arg1[%c0, %c0_0, %c0_1] : memref<2x4x128xf32, #tpu.memory_space<vmem>>, vector<2x4x128xf32>
    %c0_2 = arith.constant 0 : index
    %c0_3 = arith.constant 0 : index
    %c0_4 = arith.constant 0 : index
    %1 = vector.load %arg2[%c0_2, %c0_3, %c0_4] : memref<2x4x128xf32, #tpu.memory_space<vmem>>, vector<2x4x128xf32>
    %cst = arith.constant 0.000000e+00 : f32
    %2 = vector.broadcast %cst : f32 to vector<2x128xf32>
    %3 = vector.extract_strided_slice %0 {offsets = [0, 0, 0], sizes = [2, 1, 128], strides = [1, 1, 1]} : vector<2x4x128xf32> to vector<2x1x128xf32>
    %4 = vector.shape_cast %3 : vector<2x1x128xf32> to vector<2x128xf32>
    %5 = vector.extract_strided_slice %1 {offsets = [0, 0, 0], sizes = [2, 1, 128], strides = [1, 1, 1]} : vector<2x4x128xf32> to vector<2x1x128xf32>
    %6 = vector.shape_cast %5 : vector<2x1x128xf32> to vector<2x128xf32>
    %7 = arith.subf %4, %6 : vector<2x128xf32>
    %8 = math.absf %7 : vector<2x128xf32>
    %9 = arith.addf %2, %8 : vector<2x128xf32>
    %10 = vector.extract_strided_slice %0 {offsets = [0, 1, 0], sizes = [2, 1, 128], strides = [1, 1, 1]} : vector<2x4x128xf32> to vector<2x1x128xf32>
    %11 = vector.shape_cast %10 : vector<2x1x128xf32> to vector<2x128xf32>
    %12 = vector.extract_strided_slice %1 {offsets = [0, 1, 0], sizes = [2, 1, 128], strides = [1, 1, 1]} : vector<2x4x128xf32> to vector<2x1x128xf32>
    %13 = vector.shape_cast %12 : vector<2x1x128xf32> to vector<2x128xf32>
    %14 = arith.subf %11, %13 : vector<2x128xf32>
    %15 = math.absf %14 : vector<2x128xf32>
    %16 = arith.addf %9, %15 : vector<2x128xf32>
    %17 = vector.extract_strided_slice %0 {offsets = [0, 2, 0], sizes = [2, 1, 128], strides = [1, 1, 1]} : vector<2x4x128xf32> to vector<2x1x128xf32>
    %18 = vector.shape_cast %17 : vector<2x1x128xf32> to vector<2x128xf32>
    %19 = vector.extract_strided_slice %1 {offsets = [0, 2, 0], sizes = [2, 1, 128], strides = [1, 1, 1]} : vector<2x4x128xf32> to vector<2x1x128xf32>
    %20 = vector.shape_cast %19 : vector<2x1x128xf32> to vector<2x128xf32>
    %21 = arith.subf %18, %20 : vector<2x128xf32>
    %22 = math.absf %21 : vector<2x128xf32>
    %23 = arith.addf %16, %22 : vector<2x128xf32>
    %24 = vector.extract_strided_slice %0 {offsets = [0, 3, 0], sizes = [2, 1, 128], strides = [1, 1, 1]} : vector<2x4x128xf32> to vector<2x1x128xf32>
    %25 = vector.shape_cast %24 : vector<2x1x128xf32> to vector<2x128xf32>
    %26 = vector.extract_strided_slice %1 {offsets = [0, 3, 0], sizes = [2, 1, 128], strides = [1, 1, 1]} : vector<2x4x128xf32> to vector<2x1x128xf32>
    %27 = vector.shape_cast %26 : vector<2x1x128xf32> to vector<2x128xf32>
    %28 = arith.subf %25, %27 : vector<2x128xf32>
    %29 = math.absf %28 : vector<2x128xf32>
    %30 = arith.addf %23, %29 : vector<2x128xf32>
    %c0_5 = arith.constant 0 : index
    %c0_6 = arith.constant 0 : index
    %31 = vector.load %arg3[%c0_5, %c0_6] : memref<2x128xf32, #tpu.memory_space<vmem>>, vector<2x128xf32>
    tpu.vector_store %arg3[%c0_5, %c0_6], %30 {strides = array<i32>} : memref<2x128xf32, #tpu.memory_space<vmem>>, vector<2x128xf32>,
    return
  }
  func.func @transform_0(%arg0: i32) -> (i32, i32, i32) {
    %c0_i32 = arith.constant 0 : i32
    %c0_i32_0 = arith.constant 0 : i32
    %c0_i32_1 = arith.constant 0 : i32
    return %c0_i32, %c0_i32_0, %arg0 : i32, i32, i32
  }
  func.func @transform_1(%arg0: i32) -> (i32, i32, i32) {
    %c0_i32 = arith.constant 0 : i32
    %c0_i32_0 = arith.constant 0 : i32
    %c0_i32_1 = arith.constant 0 : i32
    return %c0_i32, %c0_i32_0, %arg0 : i32, i32, i32
  }
  func.func @transform_2(%arg0: i32) -> (i32, i32) {
    %c0_i32 = arith.constant 0 : i32
    %c0_i32_0 = arith.constant 0 : i32
    return %c0_i32, %arg0 : i32, i32
  }
}

module attributes {stable_mosaic.version = 11 : i64} {
  func.func @_mask_kernel(%arg0: i32, %arg1: memref<2x1xf32, #tpu.memory_space<vmem>>, %arg2: memref<2x128xf32, #tpu.memory_space<vmem>>, %arg3: memref<2x128xi8, #tpu.memory_space<vmem>>, %arg4: memref<2x128xf32, #tpu.memory_space<vmem>>) attributes {dimension_semantics = [#tpu.dimension_semantics<parallel>], iteration_bounds = array<i64: 2>, scalar_prefetch = 0 : i64, scratch_operands = 0 : i64, tpu.core_type = #tpu.core_type<tc>, window_params = [{pipeline_mode = #tpu.pipeline_mode<synchronous>, transform_indices = @transform_0, window_bounds = array<i64: 2, 1>}, {transform_indices = @transform_1, window_bounds = array<i64: 2, 128>}, {transform_indices = @transform_2, window_bounds = array<i64: 2, 128>}, {transform_indices = @transform_3, window_bounds = array<i64: 2, 128>}]} {
    %c0 = arith.constant 0 : index
    %c0_0 = arith.constant 0 : index
    %0 = vector.load %arg2[%c0, %c0_0] : memref<2x128xf32, #tpu.memory_space<vmem>>, vector<2x128xf32>
    %c0_1 = arith.constant 0 : index
    %c0_2 = arith.constant 0 : index
    %1 = vector.load %arg1[%c0_1, %c0_2] : memref<2x1xf32, #tpu.memory_space<vmem>>, vector<2x1xf32>
    %2 = vector.broadcast %1 : vector<2x1xf32> to vector<2x128xf32>
    %3 = arith.cmpf ogt, %0, %2 : vector<2x128xf32>
    %c0_3 = arith.constant 0 : index
    %c0_4 = arith.constant 0 : index
    %4 = vector.load %arg3[%c0_3, %c0_4] : memref<2x128xi8, #tpu.memory_space<vmem>>, vector<2x128xi8>
    %c0_i8 = arith.constant 0 : i8
    %5 = vector.broadcast %c0_i8 : i8 to vector<2x128xi8>
    %6 = arith.cmpi ne, %4, %5 : vector<2x128xi8>
    %7 = arith.ori %3, %6 : vector<2x128xi1>
    %8 = arith.extui %7 : vector<2x128xi1> to vector<2x128xi32>
    %9 = arith.sitofp %8 : vector<2x128xi32> to vector<2x128xf32>
    %c0_5 = arith.constant 0 : index
    %c0_6 = arith.constant 0 : index
    %10 = vector.load %arg4[%c0_5, %c0_6] : memref<2x128xf32, #tpu.memory_space<vmem>>, vector<2x128xf32>
    tpu.vector_store %arg4[%c0_5, %c0_6], %9 {strides = array<i32>} : memref<2x128xf32, #tpu.memory_space<vmem>>, vector<2x128xf32>,
    return
  }
  func.func @transform_0(%arg0: i32) -> (i32, i32) {
    %c0_i32 = arith.constant 0 : i32
    %c0_i32_0 = arith.constant 0 : i32
    %c0_i32_1 = arith.constant 0 : i32
    return %c0_i32, %c0_i32_0 : i32, i32
  }
  func.func @transform_1(%arg0: i32) -> (i32, i32) {
    %c0_i32 = arith.constant 0 : i32
    %c0_i32_0 = arith.constant 0 : i32
    return %c0_i32, %arg0 : i32, i32
  }
  func.func @transform_2(%arg0: i32) -> (i32, i32) {
    %c0_i32 = arith.constant 0 : i32
    %c0_i32_0 = arith.constant 0 : i32
    return %c0_i32, %arg0 : i32, i32
  }
  func.func @transform_3(%arg0: i32) -> (i32, i32) {
    %c0_i32 = arith.constant 0 : i32
    %c0_i32_0 = arith.constant 0 : i32
    return %c0_i32, %arg0 : i32, i32
  }
}

</mosaic_0001>

<llo_original>
// kernel: custom-call
$region0: #{custom-call}
  %s0 = inlined_call_operand.vmem [shape: s32[2], index: 0, kind: output, shape index: {}]

// kernel: hem_forward.4
$region0: #{hem_forward.4}
  #allocation0 [shape = 'u32[]', space=smem, size = 0x4, offset = 0x4, fixed_abs, tag = 'smem constant byte address 0x4 - core index']
  #allocation1 [shape = 'u32[144,128]{1,0:T(1,128)}', space=vmem, size = 0x12000, scoped, tag = 'internal scratch']
  %s0 = inlined_call_operand.vmem [shape: f32[2,4,256], index: 0, kind: input, shape index: {}]
  %s1 = inlined_call_operand.vmem [shape: f32[2,4,256], index: 1, kind: input, shape index: {}]
  %s2 = inlined_call_operand.vmem [shape: f32[2,256], index: 2, kind: output, shape index: {}]
  %s3 = sld [smem:[#allocation0]]
  $region123: #{hem_forward.4} parent=0
    _
  %s5 = ssub.s32 1, %s3
  %s6 = scalar_select 0, %s5, %s3
  $region1: #{hem_forward.4} parent=0
    #allocation2 [shape = 'u8[8192]{0}', space=vmem, size = 0x2000, scoped, tag = 'input window, operand 0']
    #allocation3 [shape = 'u8[8192]{0}', space=vmem, size = 0x2000, scoped, tag = 'input window, operand 1']
    loop: start=0, step=1, limit=4
    $region2: #{hem_forward.4} parent=1 // loop_pre_header
      _
    $region3: #{hem_forward.4} parent=1 // loop_header
      %s8 = sphi 0, %s12
      %p9 = scmp.ge.s32.totalorder %s8, 4
      %s18 = sphi 0, %s20
      %s21 = sphi 0, %s18
      %s22 = sphi 0, %s21
      %s38 = sphi 0, %s22
      %s44 = sphi 0, %s46
      %s47 = sphi 0, %s44
      %s48 = sphi 0, %s47
      %s64 = sphi 0, %s48
      %s70 = sphi 0, %s72
      %s73 = sphi 0, %s70
      %s74 = sphi 0, %s73
      %s90 = sphi 0, %s74
    $region4: #{hem_forward.4} parent=1 // loop_header_branch
      %11 = sbr.rel (%p9) target = $region8
    $region5: #{hem_forward.4} parent=1 // loop_body
      %s13 = ssub.s32 %s8, 1
      %s14 = ssub.s32 %s8, 2
      %s15 = sadd.s32 %s8, 1
      %s16 = ssub.s32 %s8, %s15
      %p17 = scmp.eq.s32.totalorder %s16, 0
      %s19 = sadd.s32 %s18, 1
      %s20 = scalar_select %p17, %s18, %s19
      %p23 = pneg %p17
      %p24 = scmp.eq.s32.totalorder %s8, 1
      %p25 = por %p23, %p24
      %p26 = scmp.ne.s32.totalorder %s18, %s21
      %p27 = scmp.eq.s32.totalorder %s8, 0
      %p28 = por %p26, %p27
      %p29 = scmp.ne.s32.totalorder %s18, %s21
      %p30 = scmp.eq.s32.totalorder %s13, 1
      %p31 = por %p29, %p30
      %p32 = scmp.ne.s32.totalorder %s21, %s22
      %p33 = scmp.eq.s32.totalorder %s13, 0
      %p34 = por %p32, %p33
      %p35 = scmp.ne.s32.totalorder %s21, %s22
      %p36 = scmp.eq.s32.totalorder %s14, 1
      %p37 = por %p35, %p36
      %p39 = scmp.ne.s32.totalorder %s22, %s38
      %p40 = scmp.eq.s32.totalorder %s14, 0
      %p41 = por %p39, %p40
      %s42 = ssub.s32 %s8, %s15
      %p43 = scmp.eq.s32.totalorder %s42, 0
      %s45 = sadd.s32 %s44, 1
      %s46 = scalar_select %p43, %s44, %s45
      %p49 = pneg %p43
      %p50 = scmp.eq.s32.totalorder %s8, 1
      %p51 = por %p49, %p50
      %p52 = scmp.ne.s32.totalorder %s44, %s47
      %p53 = scmp.eq.s32.totalorder %s8, 0
      %p54 = por %p52, %p53
      %p55 = scmp.ne.s32.totalorder %s44, %s47
      %p56 = scmp.eq.s32.totalorder %s13, 1
      %p57 = por %p55, %p56
      %p58 = scmp.ne.s32.totalorder %s47, %s48
      %p59 = scmp.eq.s32.totalorder %s13, 0
      %p60 = por %p58, %p59
      %p61 = scmp.ne.s32.totalorder %s47, %s48
      %p62 = scmp.eq.s32.totalorder %s14, 1
      %p63 = por %p61, %p62
      %p65 = scmp.ne.s32.totalorder %s48, %s64
      %p66 = scmp.eq.s32.totalorder %s14, 0
      %p67 = por %p65, %p66
      %s68 = ssub.s32 %s8, %s15
      %p69 = scmp.eq.s32.totalorder %s68, 0
      %s71 = sadd.s32 %s70, 1
      %s72 = scalar_select %p69, %s70, %s71
      %p75 = pneg %p69
      %p76 = scmp.eq.s32.totalorder %s8, 1
      %p77 = por %p75, %p76
      %p78 = scmp.ne.s32.totalorder %s70, %s73
      %p79 = scmp.eq.s32.totalorder %s8, 0
      %p80 = por %p78, %p79
      %p81 = scmp.ne.s32.totalorder %s70, %s73
      %p82 = scmp.eq.s32.totalorder %s13, 1
      %p83 = por %p81, %p82
      %p84 = scmp.ne.s32.totalorder %s73, %s74
      %p85 = scmp.eq.s32.totalorder %s13, 0
      %p86 = por %p84, %p85
      %p87 = scmp.ne.s32.totalorder %s73, %s74
      %p88 = scmp.eq.s32.totalorder %s14, 1
      %p89 = por %p87, %p88
      %p91 = scmp.ne.s32.totalorder %s74, %s90
      %p92 = scmp.eq.s32.totalorder %s14, 0
      %p93 = por %p91, %p92
      %p94 = scmp.le.s32.totalorder 1, %s8
      %p95 = scmp.lt.s32.totalorder %s8, 3
      %p96 = pnand %p94, %p95
      %p97 = pneg %p96
      // Predicated region
      $region9: #{hem_forward.4} parent=5 // pred_check
        _
      $region10: #{hem_forward.4} parent=5 // pred_check_branch
        %99 = sbr.rel (%p96) target = $region12
      $region11: #{hem_forward.4} parent=5 // pred_region
        %s100 = ssub.s32 %s8, 1
      $region12: #{hem_forward.4} parent=5 // pred_fallthru
        _
      %p101 = scmp.lt.s32.totalorder %s8, 2
      // Predicated region
      $region13: #{hem_forward.4} parent=5 // pred_check
        %p102 = pneg %p101
      $region14: #{hem_forward.4} parent=5 // pred_check_branch
        %104 = sbr.rel (%p102) target = $region16
      $region15: #{hem_forward.4} parent=5 // pred_region
        // Predicated region
        $region17: #{hem_forward.4} parent=15 // pred_check
          %p105 = pneg %p28
        $region18: #{hem_forward.4} parent=15 // pred_check_branch
          %107 = sbr.rel (%p105) target = $region20
        $region19: #{hem_forward.4} parent=15 // pred_region
          %s108 = sand.u32 %s18, 1
          %s109 = sand.u32 %s18, 1
          %s110 = smul.addr %s109, 8
          %s111 = scalar_lea.vmem [#allocation2], %s110
          %s112 = smul.addr %s8, 4
          %s113 = scalar_lea.vmem %s0, %s112
          // Predicated region
          $region21: #{hem_forward.4} parent=19 // pred_check
            _
          $region22: #{hem_forward.4} parent=19 // pred_check_branch
            %115 = sbr.rel (0) target = $region24
          $region23: #{hem_forward.4} parent=19 // pred_region
            // Predicated region
            $region25: #{hem_forward.4} parent=23 // pred_check
              _
            $region26: #{hem_forward.4} parent=23 // pred_check_branch
              %117 = sbr.rel target = $region28
            $region27: #{hem_forward.4} parent=23 // pred_region
              // Predicated region
              $region40: #{hem_forward.4} parent=27 // pred_check
                _
              $region41: #{hem_forward.4} parent=27 // pred_check_branch
                %134 = sbr.rel (0) target = $region43
              $region42: #{hem_forward.4} parent=27 // pred_region
                loop: start=0, step=1, limit=1
                $region44: #{hem_forward.4} parent=42 // loop_pre_header
                  _
                $region45: #{hem_forward.4} parent=42 // loop_header
                  %s136 = sphi 0, %s140
                  %p137 = scmp.ge.s32.totalorder %s136, 1
                  %s141 = sphi %s113, %s113
                  %s142 = sphi %s111, %s111
                $region46: #{hem_forward.4} parent=42 // loop_header_branch
                  %139 = sbr.rel (%p137) target = $region50
                $region47: #{hem_forward.4} parent=42 // loop_body
                  _
                $region48: #{hem_forward.4} parent=42 // loop_footer
                  %s140 = sadd.s32 1, %s136
                $region49: #{hem_forward.4} parent=42 // loop_footer_branch
                  %135 = sbr.rel target = $region45
                $region50: #{hem_forward.4} parent=42 // loop_exit
                  _
                loop: start=0, step=1, limit=1
                $region51: #{hem_forward.4} parent=42 // loop_pre_header
                  _
                $region52: #{hem_forward.4} parent=42 // loop_header
                  %s145 = sphi 0, %s149
                  %p146 = scmp.ge.s32.totalorder %s145, 1
                  %s150 = sphi %s113, %s113
                  %s151 = sphi %s111, %s111
                $region53: #{hem_forward.4} parent=42 // loop_header_branch
                  %148 = sbr.rel (%p146) target = $region57
                $region54: #{hem_forward.4} parent=42 // loop_body
                  %v152 = vld [vmem:[%s150] sm:$0xf]
                  %153 = vst [vmem:[%s151] sm:$0xf] %v152
                  %v154 = vld [vmem:[%s150 + $0x8] sm:$0xf]
                  %155 = vst [vmem:[%s151 + $0x4] sm:$0xf] %v154
                $region55: #{hem_forward.4} parent=42 // loop_footer
                  %s149 = sadd.s32 1, %s145
                $region56: #{hem_forward.4} parent=42 // loop_footer_branch
                  %144 = sbr.rel target = $region52
                $region57: #{hem_forward.4} parent=42 // loop_exit
                  _
              $region43: #{hem_forward.4} parent=27 // pred_fallthru
                _
            $region28: #{hem_forward.4} parent=23 // pred_fallthru
              _
            // Predicated region
            $region29: #{hem_forward.4} parent=23 // pred_check
              _
            $region30: #{hem_forward.4} parent=23 // pred_check_branch
              %119 = sbr.rel (0) target = $region32
            $region31: #{hem_forward.4} parent=23 // pred_region
              loop: start=0, step=1, limit=1
              $region33: #{hem_forward.4} parent=31 // loop_pre_header
                _
              $region34: #{hem_forward.4} parent=31 // loop_header
                %s122 = sphi 0, %s126
                %p123 = scmp.ge.s32.totalorder %s122, 1
                %s127 = sphi %s113, %s113
                %s128 = sphi %s111, %s111
              $region35: #{hem_forward.4} parent=31 // loop_header_branch
                %125 = sbr.rel (%p123) target = $region39
              $region36: #{hem_forward.4} parent=31 // loop_body
                %v129 = vld [vmem:[%s127] sm:$0xf]
                %130 = vst [vmem:[%s128] sm:$0xf] %v129
                %v131 = vld [vmem:[%s127 + $0x8] sm:$0xf]
                %132 = vst [vmem:[%s128 + $0x4] sm:$0xf] %v131
              $region37: #{hem_forward.4} parent=31 // loop_footer
                %s126 = sadd.s32 1, %s122
              $region38: #{hem_forward.4} parent=31 // loop_footer_branch
                %121 = sbr.rel target = $region34
              $region39: #{hem_forward.4} parent=31 // loop_exit
                _
            $region32: #{hem_forward.4} parent=23 // pred_fallthru
              _
          $region24: #{hem_forward.4} parent=19 // pred_fallthru
            _
          %156 = vnop
        $region20: #{hem_forward.4} parent=15 // pred_fallthru
          _
        // Predicated region
        $region58: #{hem_forward.4} parent=15 // pred_check
          %p157 = pneg %p54
        $region59: #{hem_forward.4} parent=15 // pred_check_branch
          %159 = sbr.rel (%p157) target = $region61
        $region60: #{hem_forward.4} parent=15 // pred_region
          %s160 = sand.u32 %s44, 1
          %s161 = sand.u32 %s44, 1
          %s162 = smul.addr %s161, 8
          %s163 = scalar_lea.vmem [#allocation3], %s162
          %s164 = smul.addr %s8, 4
          %s165 = scalar_lea.vmem %s1, %s164
          // Predicated region
          $region62: #{hem_forward.4} parent=60 // pred_check
            _
          $region63: #{hem_forward.4} parent=60 // pred_check_branch
            %167 = sbr.rel (0) target = $region65
          $region64: #{hem_forward.4} parent=60 // pred_region
            // Predicated region
            $region66: #{hem_forward.4} parent=64 // pred_check
              _
            $region67: #{hem_forward.4} parent=64 // pred_check_branch
              %169 = sbr.rel target = $region69
            $region68: #{hem_forward.4} parent=64 // pred_region
              // Predicated region
              $region81: #{hem_forward.4} parent=68 // pred_check
                _
              $region82: #{hem_forward.4} parent=68 // pred_check_branch
                %186 = sbr.rel (0) target = $region84
              $region83: #{hem_forward.4} parent=68 // pred_region
                loop: start=0, step=1, limit=1
                $region85: #{hem_forward.4} parent=83 // loop_pre_header
                  _
                $region86: #{hem_forward.4} parent=83 // loop_header
                  %s188 = sphi 0, %s192
                  %p189 = scmp.ge.s32.totalorder %s188, 1
                  %s193 = sphi %s165, %s165
                  %s194 = sphi %s163, %s163
                $region87: #{hem_forward.4} parent=83 // loop_header_branch
                  %191 = sbr.rel (%p189) target = $region91
                $region88: #{hem_forward.4} parent=83 // loop_body
                  _
                $region89: #{hem_forward.4} parent=83 // loop_footer
                  %s192 = sadd.s32 1, %s188
                $region90: #{hem_forward.4} parent=83 // loop_footer_branch
                  %187 = sbr.rel target = $region86
                $region91: #{hem_forward.4} parent=83 // loop_exit
                  _
                loop: start=0, step=1, limit=1
                $region92: #{hem_forward.4} parent=83 // loop_pre_header
                  _
                $region93: #{hem_forward.4} parent=83 // loop_header
                  %s197 = sphi 0, %s201
                  %p198 = scmp.ge.s32.totalorder %s197, 1
                  %s202 = sphi %s165, %s165
                  %s203 = sphi %s163, %s163
                $region94: #{hem_forward.4} parent=83 // loop_header_branch
                  %200 = sbr.rel (%p198) target = $region98
                $region95: #{hem_forward.4} parent=83 // loop_body
                  %v204 = vld [vmem:[%s202] sm:$0xf]
                  %205 = vst [vmem:[%s203] sm:$0xf] %v204
                  %v206 = vld [vmem:[%s202 + $0x8] sm:$0xf]
                  %207 = vst [vmem:[%s203 + $0x4] sm:$0xf] %v206
                $region96: #{hem_forward.4} parent=83 // loop_footer
                  %s201 = sadd.s32 1, %s197
                $region97: #{hem_forward.4} parent=83 // loop_footer_branch
                  %196 = sbr.rel target = $region93
                $region98: #{hem_forward.4} parent=83 // loop_exit
                  _
              $region84: #{hem_forward.4} parent=68 // pred_fallthru
                _
            $region69: #{hem_forward.4} parent=64 // pred_fallthru
              _
            // Predicated region
            $region70: #{hem_forward.4} parent=64 // pred_check
              _
            $region71: #{hem_forward.4} parent=64 // pred_check_branch
              %171 = sbr.rel (0) target = $region73
            $region72: #{hem_forward.4} parent=64 // pred_region
              loop: start=0, step=1, limit=1
              $region74: #{hem_forward.4} parent=72 // loop_pre_header
                _
              $region75: #{hem_forward.4} parent=72 // loop_header
                %s174 = sphi 0, %s178
                %p175 = scmp.ge.s32.totalorder %s174, 1
                %s179 = sphi %s165, %s165
                %s180 = sphi %s163, %s163
              $region76: #{hem_forward.4} parent=72 // loop_header_branch
                %177 = sbr.rel (%p175) target = $region80
              $region77: #{hem_forward.4} parent=72 // loop_body
                %v181 = vld [vmem:[%s179] sm:$0xf]
                %182 = vst [vmem:[%s180] sm:$0xf] %v181
                %v183 = vld [vmem:[%s179 + $0x8] sm:$0xf]
                %184 = vst [vmem:[%s180 + $0x4] sm:$0xf] %v183
              $region78: #{hem_forward.4} parent=72 // loop_footer
                %s178 = sadd.s32 1, %s174
              $region79: #{hem_forward.4} parent=72 // loop_footer_branch
                %173 = sbr.rel target = $region75
              $region80: #{hem_forward.4} parent=72 // loop_exit
                _
            $region73: #{hem_forward.4} parent=64 // pred_fallthru
              _
          $region65: #{hem_forward.4} parent=60 // pred_fallthru
            _
          %208 = vnop
        $region61: #{hem_forward.4} parent=15 // pred_fallthru
          _
      $region16: #{hem_forward.4} parent=5 // pred_fallthru
        _
      %p209 = scmp.le.s32.totalorder 1, %s8
      %p210 = scmp.lt.s32.totalorder %s8, 3
      %p211 = pnand %p209, %p210
      %p212 = pneg %p211
      // Predicated region
      $region99: #{hem_forward.4} parent=5 // pred_check
        _
      $region100: #{hem_forward.4} parent=5 // pred_check_branch
        %214 = sbr.rel (%p211) target = $region102
      $region101: #{hem_forward.4} parent=5 // pred_region
        %s215 = ssub.s32 %s8, 1
        %s216 = sand.u32 %s21, 1
        %s217 = sand.u32 %s21, 1
        %s218 = smul.addr %s217, 8
        %s219 = scalar_lea.vmem [#allocation2], %s218
        // Predicated region
        $region103: #{hem_forward.4} parent=101 // pred_check
          %p220 = pneg %p34
        $region104: #{hem_forward.4} parent=101 // pred_check_branch
          %222 = sbr.rel (%p220) target = $region106
        $region105: #{hem_forward.4} parent=101 // pred_region
          _
        $region106: #{hem_forward.4} parent=101 // pred_fallthru
          _
        %s223 = sand.u32 %s47, 1
        %s224 = sand.u32 %s47, 1
        %s225 = smul.addr %s224, 8
        %s226 = scalar_lea.vmem [#allocation3], %s225
        // Predicated region
        $region107: #{hem_forward.4} parent=101 // pred_check
          %p227 = pneg %p60
        $region108: #{hem_forward.4} parent=101 // pred_check_branch
          %229 = sbr.rel (%p227) target = $region110
        $region109: #{hem_forward.4} parent=101 // pred_region
          _
        $region110: #{hem_forward.4} parent=101 // pred_fallthru
          _
        %s230 = sand.u32 %s21, 1
        %s231 = sand.u32 %s21, 1
        %s232 = smul.addr %s231, 8
        %s233 = scalar_lea.vmem [#allocation2], %s232
        %p234 = pneg %p34
        %p235 = pneg %p31
        %s236 = sand.u32 %s47, 1
        %s237 = sand.u32 %s47, 1
        %s238 = smul.addr %s237, 8
        %s239 = scalar_lea.vmem [#allocation3], %s238
        %p240 = pneg %p60
        %p241 = pneg %p57
        %p242 = pneg %p86
        %p243 = pneg %p83
        %p244 = scmp.lt.s32.totalorder %s13, 1
        %s245 = scalar_select %p244, %s13, 1
        %s246 = smul.addr %s245, 2
        %s247 = scalar_lea.vmem %s2, %s246
        %p248 = scmp.lt.s32.totalorder %s13, 1
        %s249 = scalar_select %p248, %s13, 1
        %s250 = smul.addr %s249, 2
        %s251 = scalar_lea.vmem %s2, %s250
        %v252 = vld [vmem:[%s219] sm:$0xf]
        %v253 = vld [vmem:[%s219 + $0x4] sm:$0xf]
        %v254 = vld [vmem:[%s226] sm:$0xf]
        %v255 = vld [vmem:[%s226 + $0x4] sm:$0xf]
        %v256 = vsub.f32 %v252, %v254
        %v257 = vsub.f32 %v253, %v255
        %v258 = vand.u32 2147483647, %v256
        %v259 = vand.u32 2147483647, %v257
        %v260 = vadd.f32 %v258, 0.0
        %v261 = vadd.f32 %v259, 0.0
        %v264 = vrot.slane %v258, 1
        %v265 = vrot.slane %v259, 1
        %v268 = vadd.f32 %v260, %v264
        %v269 = vadd.f32 %v261, %v265
        %v270 = vrot.slane %v258, 2
        %v271 = vrot.slane %v259, 2
        %v274 = vadd.f32 %v268, %v270
        %v275 = vadd.f32 %v269, %v271
        %v276 = vrot.slane %v258, 3
        %v277 = vrot.slane %v259, 3
        %v280 = vadd.f32 %v274, %v276
        %v281 = vadd.f32 %v275, %v277
        %v284 = vrot.slane %v281, 7
        %vm285 = vcmask 1041409
        %v286 = vsel %vm285, %v284, %v280
        %288 = vst [vmem:[%s251] sm:$0x3] %v286
        %p289 = scmp.lt.s32.totalorder %s13, 1
        %s290 = scalar_select %p289, %s13, 1
        %s291 = smul.addr %s290, 2
        %s292 = scalar_lea.vmem %s2, %s291
        // Predicated region
        $region111: #{hem_forward.4} parent=101 // pred_check
          %p293 = pneg %p83
        $region112: #{hem_forward.4} parent=101 // pred_check_branch
          %295 = sbr.rel (%p293) target = $region114
        $region113: #{hem_forward.4} parent=101 // pred_region
          _
        $region114: #{hem_forward.4} parent=101 // pred_fallthru
          _
      $region102: #{hem_forward.4} parent=5 // pred_fallthru
        _
      %p296 = scmp.le.s32.totalorder 2, %s8
      // Predicated region
      $region115: #{hem_forward.4} parent=5 // pred_check
        %p297 = pneg %p296
      $region116: #{hem_forward.4} parent=5 // pred_check_branch
        %299 = sbr.rel (%p297) target = $region118
      $region117: #{hem_forward.4} parent=5 // pred_region
        %s300 = ssub.s32 %s8, 2
        // Predicated region
        $region119: #{hem_forward.4} parent=117 // pred_check
          %p301 = pneg %p89
        $region120: #{hem_forward.4} parent=117 // pred_check_branch
          %303 = sbr.rel (%p301) target = $region122
        $region121: #{hem_forward.4} parent=117 // pred_region
          %p304 = scmp.lt.s32.totalorder %s14, 1
          %s305 = scalar_select %p304, %s14, 1
          %s306 = smul.addr %s305, 2
          %s307 = scalar_lea.vmem %s2, %s306
        $region122: #{hem_forward.4} parent=117 // pred_fallthru
          _
      $region118: #{hem_forward.4} parent=5 // pred_fallthru
        _
    $region6: #{hem_forward.4} parent=1 // loop_footer
      %s12 = sadd.s32 1, %s8
    $region7: #{hem_forward.4} parent=1 // loop_footer_branch
      %7 = sbr.rel target = $region3
    $region8: #{hem_forward.4} parent=1 // loop_exit
      _

// kernel: hem_forward.5
$region0: #{hem_forward.5}
  #allocation0 [shape = 'u32[]', space=smem, size = 0x4, offset = 0x4, fixed_abs, tag = 'smem constant byte address 0x4 - core index']
  #allocation1 [shape = 'u32[144,128]{1,0:T(1,128)}', space=vmem, size = 0x12000, scoped, tag = 'internal scratch']
  %s0 = inlined_call_operand.vmem [shape: f32[2,1], index: 0, kind: input, shape index: {}]
  %s1 = inlined_call_operand.vmem [shape: f32[2,256], index: 1, kind: input, shape index: {}, may-alias: {1,3}]
  %s2 = inlined_call_operand.vmem [shape: s8[2,256], index: 2, kind: input, shape index: {}]
  %s3 = inlined_call_operand.vmem [shape: f32[2,256], index: 3, kind: output, shape index: {}, may-alias: {1,3}]
  %s4 = sld [smem:[#allocation0]]
  $region45: #{hem_forward.5} parent=0
    _
  %s6 = ssub.s32 1, %s4
  %s7 = scalar_select 0, %s6, %s4
  loop: start=0, step=1, limit=4
  $region2: #{hem_forward.5} parent=0 // loop_pre_header
    _
  $region3: #{hem_forward.5} parent=0 // loop_header
    %s9 = sphi 0, %s13
    %p10 = scmp.ge.s32.totalorder %s9, 4
    %s17 = sphi 0, %s17
    %s19 = sphi 0, %s17
    %s20 = sphi 0, %s19
    %s34 = sphi 0, %s20
    %s40 = sphi 0, %s42
    %s43 = sphi 0, %s40
    %s44 = sphi 0, %s43
    %s60 = sphi 0, %s44
    %s66 = sphi 0, %s68
    %s69 = sphi 0, %s66
    %s70 = sphi 0, %s69
    %s86 = sphi 0, %s70
    %s92 = sphi 0, %s94
    %s95 = sphi 0, %s92
    %s96 = sphi 0, %s95
    %s112 = sphi 0, %s96
  $region4: #{hem_forward.5} parent=0 // loop_header_branch
    %12 = sbr.rel (%p10) target = $region8
  $region5: #{hem_forward.5} parent=0 // loop_body
    %s14 = ssub.s32 %s9, 1
    %s15 = ssub.s32 %s9, 2
    %s16 = sadd.s32 %s9, 1
    %s18 = sadd.s32 %s17, 1
    %p21 = scmp.eq.s32.totalorder %s9, 1
    %p22 = scmp.ne.s32.totalorder %s17, %s19
    %p23 = scmp.eq.s32.totalorder %s9, 0
    %p24 = por %p22, %p23
    %p25 = scmp.ne.s32.totalorder %s17, %s19
    %p26 = scmp.eq.s32.totalorder %s14, 1
    %p27 = por %p25, %p26
    %p28 = scmp.ne.s32.totalorder %s19, %s20
    %p29 = scmp.eq.s32.totalorder %s14, 0
    %p30 = por %p28, %p29
    %p31 = scmp.ne.s32.totalorder %s19, %s20
    %p32 = scmp.eq.s32.totalorder %s15, 1
    %p33 = por %p31, %p32
    %p35 = scmp.ne.s32.totalorder %s20, %s34
    %p36 = scmp.eq.s32.totalorder %s15, 0
    %p37 = por %p35, %p36
    %s38 = ssub.s32 %s9, %s16
    %p39 = scmp.eq.s32.totalorder %s38, 0
    %s41 = sadd.s32 %s40, 1
    %s42 = scalar_select %p39, %s40, %s41
    %p45 = pneg %p39
    %p46 = scmp.eq.s32.totalorder %s9, 1
    %p47 = por %p45, %p46
    %p48 = scmp.ne.s32.totalorder %s40, %s43
    %p49 = scmp.eq.s32.totalorder %s9, 0
    %p50 = por %p48, %p49
    %p51 = scmp.ne.s32.totalorder %s40, %s43
    %p52 = scmp.eq.s32.totalorder %s14, 1
    %p53 = por %p51, %p52
    %p54 = scmp.ne.s32.totalorder %s43, %s44
    %p55 = scmp.eq.s32.totalorder %s14, 0
    %p56 = por %p54, %p55
    %p57 = scmp.ne.s32.totalorder %s43, %s44
    %p58 = scmp.eq.s32.totalorder %s15, 1
    %p59 = por %p57, %p58
    %p61 = scmp.ne.s32.totalorder %s44, %s60
    %p62 = scmp.eq.s32.totalorder %s15, 0
    %p63 = por %p61, %p62
    %s64 = ssub.s32 %s9, %s16
    %p65 = scmp.eq.s32.totalorder %s64, 0
    %s67 = sadd.s32 %s66, 1
    %s68 = scalar_select %p65, %s66, %s67
    %p71 = pneg %p65
    %p72 = scmp.eq.s32.totalorder %s9, 1
    %p73 = por %p71, %p72
    %p74 = scmp.ne.s32.totalorder %s66, %s69
    %p75 = scmp.eq.s32.totalorder %s9, 0
    %p76 = por %p74, %p75
    %p77 = scmp.ne.s32.totalorder %s66, %s69
    %p78 = scmp.eq.s32.totalorder %s14, 1
    %p79 = por %p77, %p78
    %p80 = scmp.ne.s32.totalorder %s69, %s70
    %p81 = scmp.eq.s32.totalorder %s14, 0
    %p82 = por %p80, %p81
    %p83 = scmp.ne.s32.totalorder %s69, %s70
    %p84 = scmp.eq.s32.totalorder %s15, 1
    %p85 = por %p83, %p84
    %p87 = scmp.ne.s32.totalorder %s70, %s86
    %p88 = scmp.eq.s32.totalorder %s15, 0
    %p89 = por %p87, %p88
    %s90 = ssub.s32 %s9, %s16
    %p91 = scmp.eq.s32.totalorder %s90, 0
    %s93 = sadd.s32 %s92, 1
    %s94 = scalar_select %p91, %s92, %s93
    %p97 = pneg %p91
    %p98 = scmp.eq.s32.totalorder %s9, 1
    %p99 = por %p97, %p98
    %p100 = scmp.ne.s32.totalorder %s92, %s95
    %p101 = scmp.eq.s32.totalorder %s9, 0
    %p102 = por %p100, %p101
    %p103 = scmp.ne.s32.totalorder %s92, %s95
    %p104 = scmp.eq.s32.totalorder %s14, 1
    %p105 = por %p103, %p104
    %p106 = scmp.ne.s32.totalorder %s95, %s96
    %p107 = scmp.eq.s32.totalorder %s14, 0
    %p108 = por %p106, %p107
    %p109 = scmp.ne.s32.totalorder %s95, %s96
    %p110 = scmp.eq.s32.totalorder %s15, 1
    %p111 = por %p109, %p110
    %p113 = scmp.ne.s32.totalorder %s96, %s112
    %p114 = scmp.eq.s32.totalorder %s15, 0
    %p115 = por %p113, %p114
    %p116 = scmp.le.s32.totalorder 1, %s9
    %p117 = scmp.lt.s32.totalorder %s9, 3
    %p118 = pnand %p116, %p117
    %p119 = pneg %p118
    // Predicated region
    $region9: #{hem_forward.5} parent=5 // pred_check
      _
    $region10: #{hem_forward.5} parent=5 // pred_check_branch
      %121 = sbr.rel (%p118) target = $region12
    $region11: #{hem_forward.5} parent=5 // pred_region
      %s122 = ssub.s32 %s9, 1
      // Predicated region
      $region13: #{hem_forward.5} parent=11 // pred_check
        %p123 = pneg %p30
      $region14: #{hem_forward.5} parent=11 // pred_check_branch
        %125 = sbr.rel (%p123) target = $region16
      $region15: #{hem_forward.5} parent=11 // pred_region
        _
      $region16: #{hem_forward.5} parent=11 // pred_fallthru
        _
    $region12: #{hem_forward.5} parent=5 // pred_fallthru
      _
    %p126 = scmp.lt.s32.totalorder %s9, 2
    // Predicated region
    $region17: #{hem_forward.5} parent=5 // pred_check
      %p127 = pneg %p126
    $region18: #{hem_forward.5} parent=5 // pred_check_branch
      %129 = sbr.rel (%p127) target = $region20
    $region19: #{hem_forward.5} parent=5 // pred_region
      // Predicated region
      $region21: #{hem_forward.5} parent=19 // pred_check
        %p130 = pneg %p50
      $region22: #{hem_forward.5} parent=19 // pred_check_branch
        %132 = sbr.rel (%p130) target = $region24
      $region23: #{hem_forward.5} parent=19 // pred_region
        %p133 = scmp.lt.s32.totalorder %s9, 1
        %s134 = scalar_select %p133, %s9, 1
        %s135 = smul.addr %s134, 2
        %s136 = scalar_lea.vmem %s1, %s135
      $region24: #{hem_forward.5} parent=19 // pred_fallthru
        _
      // Predicated region
      $region25: #{hem_forward.5} parent=19 // pred_check
        %p137 = pneg %p76
      $region26: #{hem_forward.5} parent=19 // pred_check_branch
        %139 = sbr.rel (%p137) target = $region28
      $region27: #{hem_forward.5} parent=19 // pred_region
        %p140 = scmp.lt.s32.totalorder %s9, 1
        %s141 = scalar_select %p140, %s9, 1
        %s142 = scalar_lea.vmem %s2, %s141
      $region28: #{hem_forward.5} parent=19 // pred_fallthru
        _
    $region20: #{hem_forward.5} parent=5 // pred_fallthru
      _
    %p143 = scmp.le.s32.totalorder 1, %s9
    %p144 = scmp.lt.s32.totalorder %s9, 3
    %p145 = pnand %p143, %p144
    %p146 = pneg %p145
    // Predicated region
    $region29: #{hem_forward.5} parent=5 // pred_check
      _
    $region30: #{hem_forward.5} parent=5 // pred_check_branch
      %148 = sbr.rel (%p145) target = $region32
    $region31: #{hem_forward.5} parent=5 // pred_region
      %s149 = ssub.s32 %s9, 1
      %p150 = pneg %p30
      %p151 = pneg %p27
      %p152 = scmp.lt.s32.totalorder %s14, 1
      %s153 = scalar_select %p152, %s14, 1
      %s154 = smul.addr %s153, 2
      %s155 = scalar_lea.vmem %s1, %s154
      %p156 = pneg %p56
      %p157 = pneg %p53
      %p158 = scmp.lt.s32.totalorder %s14, 1
      %s159 = scalar_select %p158, %s14, 1
      %s160 = scalar_lea.vmem %s2, %s159
      %p161 = pneg %p82
      %p162 = pneg %p79
      %p163 = pneg %p108
      %p164 = pneg %p105
      %p165 = scmp.lt.s32.totalorder %s14, 1
      %s166 = scalar_select %p165, %s14, 1
      %s167 = smul.addr %s166, 2
      %s168 = scalar_lea.vmem %s3, %s167
      %p169 = scmp.lt.s32.totalorder %s14, 1
      %s170 = scalar_select %p169, %s14, 1
      %s171 = smul.addr %s170, 2
      %s172 = scalar_lea.vmem %s1, %s171
      %p173 = scmp.lt.s32.totalorder %s14, 1
      %s174 = scalar_select %p173, %s14, 1
      %s175 = scalar_lea.vmem %s2, %s174
      %p176 = scmp.lt.s32.totalorder %s14, 1
      %s177 = scalar_select %p176, %s14, 1
      %s178 = smul.addr %s177, 2
      %s179 = scalar_lea.vmem %s3, %s178
      %v182 = vld [vmem:[%s172] sm:$0x3]
      %v183 = vld [vmem:[%s0] sm:$0x3]
      %185 = vset.pattern.permute.xlu0 0
      %186 = vperm.xlu0 %185, %v183
      %v187 = vpop.permute.xlu0 %186
      %vm189 = vcmp.gt.f32.partialorder %v182, %v187
      %v190 = vld [vmem:[%s175] sm:$0x1]
      %vm191 = vnez %v190
      %v192 = vsel %vm191, 16843009, 0
      %v193 = vunpack.c.0.s8 %v192
      %vm194 = vcmp.ne.s32.totalorder %v193, 0
      %vm195 = vmor %vm189, %vm194
      %v196 = vsel %vm195, 1, 0
      %v197 = vcvt.s32.f32 %v196
      %198 = vst [vmem:[%s179] sm:$0x3] %v197
      %p199 = scmp.lt.s32.totalorder %s14, 1
      %s200 = scalar_select %p199, %s14, 1
      %s201 = smul.addr %s200, 2
      %s202 = scalar_lea.vmem %s3, %s201
      // Predicated region
      $region33: #{hem_forward.5} parent=31 // pred_check
        %p203 = pneg %p105
      $region34: #{hem_forward.5} parent=31 // pred_check_branch
        %205 = sbr.rel (%p203) target = $region36
      $region35: #{hem_forward.5} parent=31 // pred_region
        _
      $region36: #{hem_forward.5} parent=31 // pred_fallthru
        _
    $region32: #{hem_forward.5} parent=5 // pred_fallthru
      _
    %p206 = scmp.le.s32.totalorder 2, %s9
    // Predicated region
    $region37: #{hem_forward.5} parent=5 // pred_check
      %p207 = pneg %p206
    $region38: #{hem_forward.5} parent=5 // pred_check_branch
      %209 = sbr.rel (%p207) target = $region40
    $region39: #{hem_forward.5} parent=5 // pred_region
      %s210 = ssub.s32 %s9, 2
      // Predicated region
      $region41: #{hem_forward.5} parent=39 // pred_check
        %p211 = pneg %p111
      $region42: #{hem_forward.5} parent=39 // pred_check_branch
        %213 = sbr.rel (%p211) target = $region44
      $region43: #{hem_forward.5} parent=39 // pred_region
        %p214 = scmp.lt.s32.totalorder %s15, 1
        %s215 = scalar_select %p214, %s15, 1
        %s216 = smul.addr %s215, 2
        %s217 = scalar_lea.vmem %s3, %s216
      $region44: #{hem_forward.5} parent=39 // pred_fallthru
        _
    $region40: #{hem_forward.5} parent=5 // pred_fallthru
      _
  $region6: #{hem_forward.5} parent=0 // loop_footer
    %s13 = sadd.s32 1, %s9
  $region7: #{hem_forward.5} parent=0 // loop_footer_branch
    %8 = sbr.rel target = $region3
  $region8: #{hem_forward.5} parent=0 // loop_exit
    _

</llo_original>
